<compile_context>
chip_gen: v6e
topology: v6e:2x2x1
jax: 0.10.0
libtpu: 0.0.40
codegen_flags: <defaults>
</compile_context>

<pallas_src>
import functools

import jax
import jax.numpy as jnp
from jax.experimental import pallas as pl
from jax.experimental.pallas import tpu as pltpu


def _query_vmem_capacity():
    """Per-core VMEM capacity in bytes; v7x-safe fallback if unknown."""
    try:
        info = pltpu.get_tpu_info()
        cap = int(getattr(info, "vmem_capacity_bytes", 0))
        if cap > 0:
            return cap
    except Exception:  # best-effort hardware query
        pass
    return 64 << 20


_VMEM_CAPACITY = _query_vmem_capacity()
# v7x: 64 MiB / TensorCore, 2 TCs per chip.  v5e/v6e: 128 MiB, 1 TC.
_IS_SMALL_VMEM = _VMEM_CAPACITY <= (64 << 20)


# ------------------------------- kernels ----------------------------------
def _pf_two_dot_kernel(a_ref, ksyy_ref, k_ref, out_ref):
    """out_tile = KSyy @ (A @ k_tile) for one column tile of k_prime."""
    # (S, N) @ (N, TM) -> (S, TM), f32 accumulation.
    t = jnp.dot(a_ref[...], k_ref[...], preferred_element_type=jnp.float32)
    # Cast intermediate back so the second dot stays on the native MXU path
    # when bf16 operands are used (no mixed f32*bf16 slow path).
    t = t.astype(ksyy_ref.dtype)
    # (N, S) @ (S, TM) -> (N, TM)
    out_ref[...] = jnp.dot(
        ksyy_ref[...], t, preferred_element_type=jnp.float32
    ).astype(out_ref.dtype)


def _pf_one_dot_kernel(w_ref, k_ref, out_ref):
    """out_tile = W @ k_tile with the fully collapsed (N, N) operator."""
    out_ref[...] = jnp.dot(
        w_ref[...], k_ref[...], preferred_element_type=jnp.float32
    ).astype(out_ref.dtype)


# ------------------------------- wrapper -----------------------------------
def _pick_col_tile(m_pad, want, fits):
    """Largest multiple-of-128 divisor of m_pad that is <= want and fits."""
    best = 128
    t = 128
    while t <= m_pad:
        if m_pad % t == 0 and t <= want and fits(t):
            best = t
        t += 128
    return best


@functools.partial(
    jax.jit, static_argnames=("col_tile", "compute_dtype", "collapse_nn"))
def _nystrom_pf_forward_impl(ksxx_pinv, sksxx, ksyy, sksyy_inv, k_prime, *,
                             col_tile, compute_dtype, collapse_nn):
    s, n = ksxx_pinv.shape
    assert sksxx.shape == (s, s)
    assert ksyy.shape == (n, s)
    assert sksyy_inv.shape == (s, s)
    n2, m = k_prime.shape
    assert n2 == n

    f32 = jnp.float32
    dot = functools.partial(jnp.dot, precision=jax.lax.Precision.HIGHEST,
                            preferred_element_type=f32)

    # ---- one-time constant folding (exact associativity), f32 HIGHEST ----
    ksxx_pinv_f = ksxx_pinv.astype(f32)
    r = dot(ksxx_pinv_f, ksyy.astype(f32))          # (S, S) = KSxx_pinv @ KSyy
    r = dot(sksyy_inv.astype(f32), r.T)             # (S, S)
    r = dot(r, sksxx.astype(f32))                   # (S, S)
    a = dot(r, ksxx_pinv_f)                         # (S, N): fold R into pinv

    cdt = jnp.dtype(compute_dtype)
    out_dtype = cdt
    ci = cdt.itemsize
    co = jnp.dtype(out_dtype).itemsize

    if collapse_nn:
        # Full collapse: W = KSyy @ A is (N, N); one MXU-filling dot per tile.
        w = dot(ksyy.astype(f32), a)
        const_arrays = (w.astype(cdt),)
        const_bytes = n * n * ci
        flops_per_col = 2 * n * n
        const_spec_shapes = [(n, n)]
        kernel = _pf_one_dot_kernel
    else:
        const_arrays = (a.astype(cdt), ksyy.astype(cdt))
        const_bytes = 2 * s * n * ci
        flops_per_col = 4 * s * n
        const_spec_shapes = [(s, n), (n, s)]
        kernel = _pf_two_dot_kernel

    k_prime_c = k_prime.astype(cdt)

    # ---- lane-dense column tiling of k_prime ----
    m_pad = ((m + 127) // 128) * 128
    want = max(128, (int(col_tile) // 128) * 128)

    def fits(tm_):
        stream = n * tm_ * 2 * (ci + co)            # double-buffered in/out tile
        inter = 0 if collapse_nn else 2 * s * tm_ * (4 + ci)
        return const_bytes + stream + inter <= int(0.70 * _VMEM_CAPACITY)

    tm = _pick_col_tile(m_pad, want, fits)
    # Give the second TensorCore work on small-VMEM (v7x-like) parts only;
    # on single-core v5e/v6e the split would just add grid-step overhead.
    if _IS_SMALL_VMEM and m_pad // tm < 2 and m_pad >= 256:
        half = m_pad // 2
        tm = half if half % 128 == 0 else 128

    if m_pad != m:
        k_prime_c = jnp.pad(k_prime_c, ((0, 0), (0, m_pad - m)))

    grid = (m_pad // tm,)

    # TODO(synk): for very large N (constants that no longer fit in VMEM) add
    # an N-reduction grid axis with an (S, TM) f32 accumulator instead of
    # keeping the full (S, N) / (N, S) constants resident.
    in_specs = [
        # Constants: same block every step -> fetched once, single-buffered.
        pl.BlockSpec(shape, lambda j: (0, 0), pipeline_mode=pl.Buffered(1))
        for shape in const_spec_shapes
    ]
    # Streamed, double-buffered, lane-dense column tile of k_prime.
    in_specs.append(pl.BlockSpec((n, tm), lambda j: (0, j)))
    out_specs = pl.BlockSpec((n, tm), lambda j: (0, j))

    # ---- scheduler / VMEM hints (kept in sync with the dtypes used) ----
    flops = flops_per_col * m_pad
    io_bytes = const_bytes + n * m_pad * (ci + co)
    cost = pl.CostEstimate(flops=int(flops), transcendentals=0,
                           bytes_accessed=int(io_bytes))

    stream_bytes = n * tm * 2 * (ci + co)
    inter_bytes = 0 if collapse_nn else 2 * s * tm * (4 + ci)
    vmem_need = const_bytes + stream_bytes + inter_bytes
    vmem_limit = int(min(max(int(1.5 * vmem_need), 32 << 20),
                         int(0.85 * _VMEM_CAPACITY)))

    out_padded = pl.pallas_call(
        kernel,
        out_shape=jax.ShapeDtypeStruct((n, m_pad), out_dtype),
        grid_spec=pltpu.PrefetchScalarGridSpec(
            num_scalar_prefetch=0,
            grid=grid,
            in_specs=in_specs,
            out_specs=out_specs,
        ),
        compiler_params=pltpu.CompilerParams(
            dimension_semantics=("parallel",),
            vmem_limit_bytes=vmem_limit,
        ),
        cost_estimate=cost,
    )(*const_arrays, k_prime_c)
    return out_padded[:, :m]


def nystrom_pf_forward(ksxx_pinv, sksxx, ksyy, sksyy_inv, k_prime, *,
                       col_tile=512, compute_dtype=jnp.float32,
                       collapse_nn=None):
    """Forward pass of NystromPFOperator: map2(map1(k_prime))."""
    s, n = ksxx_pinv.shape
    if collapse_nn is None:
        itemsize = jnp.dtype(compute_dtype).itemsize
        # Full (N, N) collapse fills the MXU when N is small; only worth it
        # when the extra 2*TM*N^2 FLOPs are covered and (N, N) fits easily.
        collapse_nn = (n <= 4 * s) and (n * n * itemsize <= _VMEM_CAPACITY // 8)
    return _nystrom_pf_forward_impl(
        ksxx_pinv, sksxx, ksyy, sksyy_inv, k_prime,
        col_tile=int(col_tile), compute_dtype=compute_dtype,
        collapse_nn=bool(collapse_nn))


# ------------------------- parameter construction -------------------------
def _rbf(a, b, gamma=0.5):
    # a: (p, d), b: (q, d) -> (p, q)
    sq = (jnp.sum(a * a, -1)[:, None] + jnp.sum(b * b, -1)[None, :]
          - 2.0 * a @ b.T)
    return jnp.exp(-gamma * jnp.maximum(sq, 0.0))


def build_params(key, n, d, samples, epsilon=1e-8):
    """Deterministic stand-in for recursiveNystrom outputs.

    recursiveNystrom returns C = K(X, X[rInd]) of shape (n, samples) and
    W = C[rInd] of shape (samples, samples).  We build those directly from an
    RBF kernel with rInd = arange(samples); the randomized landmark selection
    (and pinv/inv) is one-time init glue, not part of the forward hot path.
    """
    kx, ky = jax.random.split(key)
    x = jax.random.normal(kx, (n, d), jnp.float32)
    y = jax.random.normal(ky, (n, d), jnp.float32)

    ksxx = _rbf(x, x[:samples])                 # (n, samples)
    sksxx = ksxx[:samples, :]                   # (samples, samples)
    ksyy = _rbf(y, y[:samples])                 # (n, samples)
    sksyy = ksyy[:samples, :]                   # (samples, samples)

    ksxx_pinv = jnp.linalg.pinv(ksxx)           # (samples, n)
    sksyy_inv = jnp.linalg.inv(
        sksyy + samples * epsilon * jnp.eye(samples, dtype=jnp.float32))
    return ksxx_pinv, sksxx, ksyy, sksyy_inv


def reference_forward(ksxx_pinv, sksxx, ksyy, sksyy_inv, k_prime):
    """Original 6-matmul chain (true-f32 reference)."""
    dot = functools.partial(jnp.dot, precision=jax.lax.Precision.HIGHEST)
    out = dot(ksxx_pinv, k_prime)
    out = dot(sksxx, out)
    out = dot(ksxx_pinv.T, out)      # map1 done
    out = dot(ksyy.T, out)
    out = dot(sksyy_inv, out)
    out = dot(ksyy, out)             # map2 done
    return out


if __name__ == "__main__":
    n = 256        # nx == ny (required by the chained maps)
    d = 8          # feature dim of x / y
    samples = 128  # Nystrom landmark count S (multiple of 128 -> lane-dense)
    m = 512        # number of columns of k_prime

    key = jax.random.PRNGKey(0)
    kp_key, param_key = jax.random.split(key)

    ksxx_pinv, sksxx, ksyy, sksyy_inv = build_params(param_key, n, d, samples)
    k_prime = jax.random.normal(kp_key, (n, m), jnp.float32)

    ref = reference_forward(ksxx_pinv, sksxx, ksyy, sksyy_inv, k_prime)

    def rel_err(out):
        return float(jnp.linalg.norm(out.astype(jnp.float32) - ref)
                     / (jnp.linalg.norm(ref) + 1e-30))

    # f32 path; at these shapes the wrapper auto-collapses the whole chain to
    # a single lane/row-dense (N, N) @ (N, TM) dot.
    out = jax.block_until_ready(
        nystrom_pf_forward(ksxx_pinv, sksxx, ksyy, sksyy_inv, k_prime,
                           col_tile=512))
    assert out.shape == (n, m)
    e = rel_err(out)
    assert e < 1e-4, f"f32 collapsed path: relative error too large: {e}"

    # f32 path with the general two-dot kernel (the structure used at large N).
    out2 = jax.block_until_ready(
        nystrom_pf_forward(ksxx_pinv, sksxx, ksyy, sksyy_inv, k_prime,
                           col_tile=512, collapse_nn=False))
    e2 = rel_err(out2)
    assert e2 < 1e-4, f"f32 two-dot path: relative error too large: {e2}"

    # bf16 fast path (half the HBM traffic, native MXU rate); tolerance is
    # loosened because constants / k_prime / output are truncated to bf16.
    out3 = jax.block_until_ready(
        nystrom_pf_forward(ksxx_pinv, sksxx, ksyy, sksyy_inv, k_prime,
                           col_tile=512, compute_dtype=jnp.bfloat16))
    e3 = rel_err(out3)
    assert e3 < 1e-1, f"bf16 path: relative error too large: {e3}"

    print("KERNEL_OK")
</pallas_src>

<mosaic_0001>
module attributes {stable_mosaic.version = 11 : i64} {
  func.func @_pf_one_dot_kernel(%arg0: i32, %arg1: memref<256x256xf32, #tpu.memory_space<vmem>>, %arg2: memref<256x256xf32, #tpu.memory_space<vmem>>, %arg3: memref<256x256xf32, #tpu.memory_space<vmem>>) attributes {dimension_semantics = [#tpu.dimension_semantics<parallel>], iteration_bounds = array<i64: 2>, scalar_prefetch = 0 : i64, scratch_operands = 0 : i64, tpu.core_type = #tpu.core_type<tc>, window_params = [{pipeline_mode = #tpu.pipeline_mode<synchronous>, transform_indices = @transform_0, window_bounds = array<i64: 256, 256>}, {transform_indices = @transform_1, window_bounds = array<i64: 256, 256>}, {transform_indices = @transform_2, window_bounds = array<i64: 256, 256>}]} {
    %c0 = arith.constant 0 : index
    %c0_0 = arith.constant 0 : index
    %0 = vector.load %arg1[%c0, %c0_0] : memref<256x256xf32, #tpu.memory_space<vmem>>, vector<256x256xf32>
    %c0_1 = arith.constant 0 : index
    %c0_2 = arith.constant 0 : index
    %1 = vector.load %arg2[%c0_1, %c0_2] : memref<256x256xf32, #tpu.memory_space<vmem>>, vector<256x256xf32>
    %cst = arith.constant dense<0.000000e+00> : vector<256x256xf32>
    %2 = tpu.matmul %0, %1, %cst {dimension_numbers = #tpu.dot_dimension_numbers<[1], [0], [0], [1], [0, 0, 1, 1], [], []>} : vector<256x256xf32>, vector<256x256xf32>, vector<256x256xf32> -> vector<256x256xf32>
    %c0_3 = arith.constant 0 : index
    %c0_4 = arith.constant 0 : index
    %3 = vector.load %arg3[%c0_3, %c0_4] : memref<256x256xf32, #tpu.memory_space<vmem>>, vector<256x256xf32>
    tpu.vector_store %arg3[%c0_3, %c0_4], %2 {strides = array<i32>} : memref<256x256xf32, #tpu.memory_space<vmem>>, vector<256x256xf32>,
    return
  }
  func.func @transform_0(%arg0: i32) -> (i32, i32) {
    %c0_i32 = arith.constant 0 : i32
    %c0_i32_0 = arith.constant 0 : i32
    %c0_i32_1 = arith.constant 0 : i32
    return %c0_i32, %c0_i32_0 : i32, i32
  }
  func.func @transform_1(%arg0: i32) -> (i32, i32) {
    %c0_i32 = arith.constant 0 : i32
    %c0_i32_0 = arith.constant 0 : i32
    return %c0_i32, %arg0 : i32, i32
  }
  func.func @transform_2(%arg0: i32) -> (i32, i32) {
    %c0_i32 = arith.constant 0 : i32
    %c0_i32_0 = arith.constant 0 : i32
    return %c0_i32, %arg0 : i32, i32
  }
}

</mosaic_0001>

<llo_original>
// kernel: _nystrom_pf_forward_impl.1
$region0: #{_nystrom_pf_forward_impl.1}
  #allocation0 [shape = 'u32[]', space=smem, size = 0x4, offset = 0x4, fixed_abs, tag = 'smem constant byte address 0x4 - core index']
  #allocation1 [shape = 'u32[144,128]{1,0:T(1,128)}', space=vmem, size = 0x12000, scoped, tag = 'internal scratch']
  %s0 = inlined_call_operand.vmem [shape: f32[256,256], index: 0, kind: input, shape index: {}]
  %s1 = inlined_call_operand.vmem [shape: f32[256,512], index: 1, kind: input, shape index: {}]
  %s2 = inlined_call_operand.hbm [shape: f32[256,512], index: 2, kind: output, shape index: {}]
  %s3 = sld [smem:[#allocation0]]
  $region64: #{_nystrom_pf_forward_impl.1} parent=0
    _
  %s5 = ssub.s32 1, %s3
  %s6 = scalar_select 0, %s5, %s3
  $region1: #{_nystrom_pf_forward_impl.1} parent=0
    #allocation2 [shape = 'u8[524288]{0}', space=vmem, size = 0x80000, scoped, tag = 'input window, operand 1']
    #allocation3 [shape = 'u8[524288]{0}', space=vmem, size = 0x80000, scoped, tag = 'output window, operand 0']
    #allocation4 [shape = 's32[2]{0}', space=sflag, size = 0x8, scoped, tag = 'scoped memory for _nystrom_pf_forward_impl.1']
    %7 = vsyncpa [#allocation4], 0
    %s8 = scalar_lea.sflag [#allocation4], 1
    %9 = vsyncpa %s8, 0
    loop: start=0, step=1, limit=4
    $region2: #{_nystrom_pf_forward_impl.1} parent=1 // loop_pre_header
      _
    $region3: #{_nystrom_pf_forward_impl.1} parent=1 // loop_header
      %s11 = sphi 0, %s15
      %p12 = scmp.ge.s32.totalorder %s11, 4
      %s19 = sphi 0, %s19
      %s21 = sphi 0, %s19
      %s22 = sphi 0, %s21
      %s36 = sphi 0, %s22
      %s42 = sphi 0, %s44
      %s45 = sphi 0, %s42
      %s46 = sphi 0, %s45
      %s62 = sphi 0, %s46
      %s68 = sphi 0, %s70
      %s71 = sphi 0, %s68
      %s72 = sphi 0, %s71
      %s88 = sphi 0, %s72
    $region4: #{_nystrom_pf_forward_impl.1} parent=1 // loop_header_branch
      %14 = sbr.rel (%p12) target = $region8
    $region5: #{_nystrom_pf_forward_impl.1} parent=1 // loop_body
      %s16 = ssub.s32 %s11, 1
      %s17 = ssub.s32 %s11, 2
      %s18 = sadd.s32 %s11, 1
      %s20 = sadd.s32 %s19, 1
      %p23 = scmp.eq.s32.totalorder %s11, 1
      %p24 = scmp.ne.s32.totalorder %s19, %s21
      %p25 = scmp.eq.s32.totalorder %s11, 0
      %p26 = por %p24, %p25
      %p27 = scmp.ne.s32.totalorder %s19, %s21
      %p28 = scmp.eq.s32.totalorder %s16, 1
      %p29 = por %p27, %p28
      %p30 = scmp.ne.s32.totalorder %s21, %s22
      %p31 = scmp.eq.s32.totalorder %s16, 0
      %p32 = por %p30, %p31
      %p33 = scmp.ne.s32.totalorder %s21, %s22
      %p34 = scmp.eq.s32.totalorder %s17, 1
      %p35 = por %p33, %p34
      %p37 = scmp.ne.s32.totalorder %s22, %s36
      %p38 = scmp.eq.s32.totalorder %s17, 0
      %p39 = por %p37, %p38
      %s40 = ssub.s32 %s11, %s18
      %p41 = scmp.eq.s32.totalorder %s40, 0
      %s43 = sadd.s32 %s42, 1
      %s44 = scalar_select %p41, %s42, %s43
      %p47 = pneg %p41
      %p48 = scmp.eq.s32.totalorder %s11, 1
      %p49 = por %p47, %p48
      %p50 = scmp.ne.s32.totalorder %s42, %s45
      %p51 = scmp.eq.s32.totalorder %s11, 0
      %p52 = por %p50, %p51
      %p53 = scmp.ne.s32.totalorder %s42, %s45
      %p54 = scmp.eq.s32.totalorder %s16, 1
      %p55 = por %p53, %p54
      %p56 = scmp.ne.s32.totalorder %s45, %s46
      %p57 = scmp.eq.s32.totalorder %s16, 0
      %p58 = por %p56, %p57
      %p59 = scmp.ne.s32.totalorder %s45, %s46
      %p60 = scmp.eq.s32.totalorder %s17, 1
      %p61 = por %p59, %p60
      %p63 = scmp.ne.s32.totalorder %s46, %s62
      %p64 = scmp.eq.s32.totalorder %s17, 0
      %p65 = por %p63, %p64
      %s66 = ssub.s32 %s11, %s18
      %p67 = scmp.eq.s32.totalorder %s66, 0
      %s69 = sadd.s32 %s68, 1
      %s70 = scalar_select %p67, %s68, %s69
      %p73 = pneg %p67
      %p74 = scmp.eq.s32.totalorder %s11, 1
      %p75 = por %p73, %p74
      %p76 = scmp.ne.s32.totalorder %s68, %s71
      %p77 = scmp.eq.s32.totalorder %s11, 0
      %p78 = por %p76, %p77
      %p79 = scmp.ne.s32.totalorder %s68, %s71
      %p80 = scmp.eq.s32.totalorder %s16, 1
      %p81 = por %p79, %p80
      %p82 = scmp.ne.s32.totalorder %s71, %s72
      %p83 = scmp.eq.s32.totalorder %s16, 0
      %p84 = por %p82, %p83
      %p85 = scmp.ne.s32.totalorder %s71, %s72
      %p86 = scmp.eq.s32.totalorder %s17, 1
      %p87 = por %p85, %p86
      %p89 = scmp.ne.s32.totalorder %s72, %s88
      %p90 = scmp.eq.s32.totalorder %s17, 0
      %p91 = por %p89, %p90
      %p92 = scmp.le.s32.totalorder 1, %s11
      %p93 = scmp.lt.s32.totalorder %s11, 3
      %p94 = pnand %p92, %p93
      %p95 = pneg %p94
      // Predicated region
      $region9: #{_nystrom_pf_forward_impl.1} parent=5 // pred_check
        _
      $region10: #{_nystrom_pf_forward_impl.1} parent=5 // pred_check_branch
        %97 = sbr.rel (%p94) target = $region12
      $region11: #{_nystrom_pf_forward_impl.1} parent=5 // pred_region
        %s98 = ssub.s32 %s11, 1
        // Predicated region
        $region13: #{_nystrom_pf_forward_impl.1} parent=11 // pred_check
          %p99 = pneg %p32
        $region14: #{_nystrom_pf_forward_impl.1} parent=11 // pred_check_branch
          %101 = sbr.rel (%p99) target = $region16
        $region15: #{_nystrom_pf_forward_impl.1} parent=11 // pred_region
          _
        $region16: #{_nystrom_pf_forward_impl.1} parent=11 // pred_fallthru
          _
      $region12: #{_nystrom_pf_forward_impl.1} parent=5 // pred_fallthru
        _
      %p102 = scmp.lt.s32.totalorder %s11, 2
      // Predicated region
      $region17: #{_nystrom_pf_forward_impl.1} parent=5 // pred_check
        %p103 = pneg %p102
      $region18: #{_nystrom_pf_forward_impl.1} parent=5 // pred_check_branch
        %105 = sbr.rel (%p103) target = $region20
      $region19: #{_nystrom_pf_forward_impl.1} parent=5 // pred_region
        // Predicated region
        $region21: #{_nystrom_pf_forward_impl.1} parent=19 // pred_check
          %p106 = pneg %p52
        $region22: #{_nystrom_pf_forward_impl.1} parent=19 // pred_check_branch
          %108 = sbr.rel (%p106) target = $region24
        $region23: #{_nystrom_pf_forward_impl.1} parent=19 // pred_region
          %s109 = sand.u32 %s42, 1
          %s110 = sand.u32 %s42, 1
          %s111 = smul.addr %s110, 512
          %s112 = scalar_lea.vmem [#allocation2], %s111
          %s113 = smul.u32 2, %s11
          %s114 = smul.addr %s113, 8
          %s115 = scalar_lea.vmem %s1, %s114
          // Predicated region
          $region25: #{_nystrom_pf_forward_impl.1} parent=23 // pred_check
            _
          $region26: #{_nystrom_pf_forward_impl.1} parent=23 // pred_check_branch
            %117 = sbr.rel (0) target = $region28
          $region27: #{_nystrom_pf_forward_impl.1} parent=23 // pred_region
            // Predicated region
            $region29: #{_nystrom_pf_forward_impl.1} parent=27 // pred_check
              _
            $region30: #{_nystrom_pf_forward_impl.1} parent=27 // pred_check_branch
              %119 = sbr.rel (0) target = $region32
            $region31: #{_nystrom_pf_forward_impl.1} parent=27 // pred_region
              loop: start=0, step=1, limit=1
              $region33: #{_nystrom_pf_forward_impl.1} parent=31 // loop_pre_header
                _
              $region34: #{_nystrom_pf_forward_impl.1} parent=31 // loop_header
                %s121 = sphi 0, %s125
                %p122 = scmp.ge.s32.totalorder %s121, 1
                %s126 = sphi %s115, %s115
                %s127 = sphi %s112, %s112
              $region35: #{_nystrom_pf_forward_impl.1} parent=31 // loop_header_branch
                %124 = sbr.rel (%p122) target = $region39
              $region36: #{_nystrom_pf_forward_impl.1} parent=31 // loop_body
                %v128 = vld [vmem:[%s126] sm:$0xff]
                %129 = vst [vmem:[%s127] sm:$0xff] %v128
                %v130 = vld [vmem:[%s126 + $0x8] sm:$0xff]
                %131 = vst [vmem:[%s127 + $0x8] sm:$0xff] %v130
                %v132 = vld [vmem:[%s126 + $0x20] sm:$0xff]
                %133 = vst [vmem:[%s127 + $0x10] sm:$0xff] %v132
                %v134 = vld [vmem:[%s126 + $0x28] sm:$0xff]
                %135 = vst [vmem:[%s127 + $0x18] sm:$0xff] %v134
                %v136 = vld [vmem:[%s126 + $0x40] sm:$0xff]
                %137 = vst [vmem:[%s127 + $0x20] sm:$0xff] %v136
                %v138 = vld [vmem:[%s126 + $0x48] sm:$0xff]
                %139 = vst [vmem:[%s127 + $0x28] sm:$0xff] %v138
                %v140 = vld [vmem:[%s126 + $0x60] sm:$0xff]
                %141 = vst [vmem:[%s127 + $0x30] sm:$0xff] %v140
                %v142 = vld [vmem:[%s126 + $0x68] sm:$0xff]
                %143 = vst [vmem:[%s127 + $0x38] sm:$0xff] %v142
                %v144 = vld [vmem:[%s126 + $0x80] sm:$0xff]
                %145 = vst [vmem:[%s127 + $0x40] sm:$0xff] %v144
                %v146 = vld [vmem:[%s126 + $0x88] sm:$0xff]
                %147 = vst [vmem:[%s127 + $0x48] sm:$0xff] %v146
                %v148 = vld [vmem:[%s126 + $0xa0] sm:$0xff]
                %149 = vst [vmem:[%s127 + $0x50] sm:$0xff] %v148
                %v150 = vld [vmem:[%s126 + $0xa8] sm:$0xff]
                %151 = vst [vmem:[%s127 + $0x58] sm:$0xff] %v150
                %v152 = vld [vmem:[%s126 + $0xc0] sm:$0xff]
                %153 = vst [vmem:[%s127 + $0x60] sm:$0xff] %v152
                %v154 = vld [vmem:[%s126 + $0xc8] sm:$0xff]
                %155 = vst [vmem:[%s127 + $0x68] sm:$0xff] %v154
                %v156 = vld [vmem:[%s126 + $0xe0] sm:$0xff]
                %157 = vst [vmem:[%s127 + $0x70] sm:$0xff] %v156
                %v158 = vld [vmem:[%s126 + $0xe8] sm:$0xff]
                %159 = vst [vmem:[%s127 + $0x78] sm:$0xff] %v158
                %v160 = vld [vmem:[%s126 + $0x100] sm:$0xff]
                %161 = vst [vmem:[%s127 + $0x80] sm:$0xff] %v160
                %v162 = vld [vmem:[%s126 + $0x108] sm:$0xff]
                %163 = vst [vmem:[%s127 + $0x88] sm:$0xff] %v162
                %v164 = vld [vmem:[%s126 + $0x120] sm:$0xff]
                %165 = vst [vmem:[%s127 + $0x90] sm:$0xff] %v164
                %v166 = vld [vmem:[%s126 + $0x128] sm:$0xff]
                %167 = vst [vmem:[%s127 + $0x98] sm:$0xff] %v166
                %v168 = vld [vmem:[%s126 + $0x140] sm:$0xff]
                %169 = vst [vmem:[%s127 + $0xa0] sm:$0xff] %v168
                %v170 = vld [vmem:[%s126 + $0x148] sm:$0xff]
                %171 = vst [vmem:[%s127 + $0xa8] sm:$0xff] %v170
                %v172 = vld [vmem:[%s126 + $0x160] sm:$0xff]
                %173 = vst [vmem:[%s127 + $0xb0] sm:$0xff] %v172
                %v174 = vld [vmem:[%s126 + $0x168] sm:$0xff]
                %175 = vst [vmem:[%s127 + $0xb8] sm:$0xff] %v174
                %v176 = vld [vmem:[%s126 + $0x180] sm:$0xff]
                %177 = vst [vmem:[%s127 + $0xc0] sm:$0xff] %v176
                %v178 = vld [vmem:[%s126 + $0x188] sm:$0xff]
                %179 = vst [vmem:[%s127 + $0xc8] sm:$0xff] %v178
                %v180 = vld [vmem:[%s126 + $0x1a0] sm:$0xff]
                %181 = vst [vmem:[%s127 + $0xd0] sm:$0xff] %v180
                %v182 = vld [vmem:[%s126 + $0x1a8] sm:$0xff]
                %183 = vst [vmem:[%s127 + $0xd8] sm:$0xff] %v182
                %v184 = vld [vmem:[%s126 + $0x1c0] sm:$0xff]
                %185 = vst [vmem:[%s127 + $0xe0] sm:$0xff] %v184
                %v186 = vld [vmem:[%s126 + $0x1c8] sm:$0xff]
                %187 = vst [vmem:[%s127 + $0xe8] sm:$0xff] %v186
                %v188 = vld [vmem:[%s126 + $0x1e0] sm:$0xff]
                %189 = vst [vmem:[%s127 + $0xf0] sm:$0xff] %v188
                %v190 = vld [vmem:[%s126 + $0x1e8] sm:$0xff]
                %191 = vst [vmem:[%s127 + $0xf8] sm:$0xff] %v190
                %v192 = vld [vmem:[%s126 + $0x200] sm:$0xff]
                %193 = vst [vmem:[%s127 + $0x100] sm:$0xff] %v192
                %v194 = vld [vmem:[%s126 + $0x208] sm:$0xff]
                %195 = vst [vmem:[%s127 + $0x108] sm:$0xff] %v194
                %v196 = vld [vmem:[%s126 + $0x220] sm:$0xff]
                %197 = vst [vmem:[%s127 + $0x110] sm:$0xff] %v196
                %v198 = vld [vmem:[%s126 + $0x228] sm:$0xff]
                %199 = vst [vmem:[%s127 + $0x118] sm:$0xff] %v198
                %v200 = vld [vmem:[%s126 + $0x240] sm:$0xff]
                %201 = vst [vmem:[%s127 + $0x120] sm:$0xff] %v200
                %v202 = vld [vmem:[%s126 + $0x248] sm:$0xff]
                %203 = vst [vmem:[%s127 + $0x128] sm:$0xff] %v202
                %v204 = vld [vmem:[%s126 + $0x260] sm:$0xff]
                %205 = vst [vmem:[%s127 + $0x130] sm:$0xff] %v204
                %v206 = vld [vmem:[%s126 + $0x268] sm:$0xff]
                %207 = vst [vmem:[%s127 + $0x138] sm:$0xff] %v206
                %v208 = vld [vmem:[%s126 + $0x280] sm:$0xff]
                %209 = vst [vmem:[%s127 + $0x140] sm:$0xff] %v208
                %v210 = vld [vmem:[%s126 + $0x288] sm:$0xff]
                %211 = vst [vmem:[%s127 + $0x148] sm:$0xff] %v210
                %v212 = vld [vmem:[%s126 + $0x2a0] sm:$0xff]
                %213 = vst [vmem:[%s127 + $0x150] sm:$0xff] %v212
                %v214 = vld [vmem:[%s126 + $0x2a8] sm:$0xff]
                %215 = vst [vmem:[%s127 + $0x158] sm:$0xff] %v214
                %v216 = vld [vmem:[%s126 + $0x2c0] sm:$0xff]
                %217 = vst [vmem:[%s127 + $0x160] sm:$0xff] %v216
                %v218 = vld [vmem:[%s126 + $0x2c8] sm:$0xff]
                %219 = vst [vmem:[%s127 + $0x168] sm:$0xff] %v218
                %v220 = vld [vmem:[%s126 + $0x2e0] sm:$0xff]
                %221 = vst [vmem:[%s127 + $0x170] sm:$0xff] %v220
                %v222 = vld [vmem:[%s126 + $0x2e8] sm:$0xff]
                %223 = vst [vmem:[%s127 + $0x178] sm:$0xff] %v222
                %v224 = vld [vmem:[%s126 + $0x300] sm:$0xff]
                %225 = vst [vmem:[%s127 + $0x180] sm:$0xff] %v224
                %v226 = vld [vmem:[%s126 + $0x308] sm:$0xff]
                %227 = vst [vmem:[%s127 + $0x188] sm:$0xff] %v226
                %v228 = vld [vmem:[%s126 + $0x320] sm:$0xff]
                %229 = vst [vmem:[%s127 + $0x190] sm:$0xff] %v228
                %v230 = vld [vmem:[%s126 + $0x328] sm:$0xff]
                %231 = vst [vmem:[%s127 + $0x198] sm:$0xff] %v230
                %v232 = vld [vmem:[%s126 + $0x340] sm:$0xff]
                %233 = vst [vmem:[%s127 + $0x1a0] sm:$0xff] %v232
                %v234 = vld [vmem:[%s126 + $0x348] sm:$0xff]
                %235 = vst [vmem:[%s127 + $0x1a8] sm:$0xff] %v234
                %v236 = vld [vmem:[%s126 + $0x360] sm:$0xff]
                %237 = vst [vmem:[%s127 + $0x1b0] sm:$0xff] %v236
                %v238 = vld [vmem:[%s126 + $0x368] sm:$0xff]
                %239 = vst [vmem:[%s127 + $0x1b8] sm:$0xff] %v238
                %v240 = vld [vmem:[%s126 + $0x380] sm:$0xff]
                %241 = vst [vmem:[%s127 + $0x1c0] sm:$0xff] %v240
                %v242 = vld [vmem:[%s126 + $0x388] sm:$0xff]
                %243 = vst [vmem:[%s127 + $0x1c8] sm:$0xff] %v242
                %v244 = vld [vmem:[%s126 + $0x3a0] sm:$0xff]
                %245 = vst [vmem:[%s127 + $0x1d0] sm:$0xff] %v244
                %v246 = vld [vmem:[%s126 + $0x3a8] sm:$0xff]
                %247 = vst [vmem:[%s127 + $0x1d8] sm:$0xff] %v246
                %v248 = vld [vmem:[%s126 + $0x3c0] sm:$0xff]
                %249 = vst [vmem:[%s127 + $0x1e0] sm:$0xff] %v248
                %v250 = vld [vmem:[%s126 + $0x3c8] sm:$0xff]
                %251 = vst [vmem:[%s127 + $0x1e8] sm:$0xff] %v250
                %v252 = vld [vmem:[%s126 + $0x3e0] sm:$0xff]
                %253 = vst [vmem:[%s127 + $0x1f0] sm:$0xff] %v252
                %v254 = vld [vmem:[%s126 + $0x3e8] sm:$0xff]
                %255 = vst [vmem:[%s127 + $0x1f8] sm:$0xff] %v254
              $region37: #{_nystrom_pf_forward_impl.1} parent=31 // loop_footer
                %s125 = sadd.s32 1, %s121
              $region38: #{_nystrom_pf_forward_impl.1} parent=31 // loop_footer_branch
                %120 = sbr.rel target = $region34
              $region39: #{_nystrom_pf_forward_impl.1} parent=31 // loop_exit
                _
            $region32: #{_nystrom_pf_forward_impl.1} parent=27 // pred_fallthru
              _
            // Predicated region
            $region40: #{_nystrom_pf_forward_impl.1} parent=27 // pred_check
              _
            $region41: #{_nystrom_pf_forward_impl.1} parent=27 // pred_check_branch
              %257 = sbr.rel target = $region43
            $region42: #{_nystrom_pf_forward_impl.1} parent=27 // pred_region
              _
            $region43: #{_nystrom_pf_forward_impl.1} parent=27 // pred_fallthru
              _
          $region28: #{_nystrom_pf_forward_impl.1} parent=23 // pred_fallthru
            _
          %258 = vnop
        $region24: #{_nystrom_pf_forward_impl.1} parent=19 // pred_fallthru
          _
      $region20: #{_nystrom_pf_forward_impl.1} parent=5 // pred_fallthru
        _
      %p259 = scmp.le.s32.totalorder 1, %s11
      %p260 = scmp.lt.s32.totalorder %s11, 3
      %p261 = pnand %p259, %p260
      %p262 = pneg %p261
      // Predicated region
      $region44: #{_nystrom_pf_forward_impl.1} parent=5 // pred_check
        _
      $region45: #{_nystrom_pf_forward_impl.1} parent=5 // pred_check_branch
        %264 = sbr.rel (%p261) target = $region47
      $region46: #{_nystrom_pf_forward_impl.1} parent=5 // pred_region
        %s265 = ssub.s32 %s11, 1
        %s266 = sand.u32 %s45, 1
        %s267 = sand.u32 %s45, 1
        %s268 = smul.addr %s267, 512
        %s269 = scalar_lea.vmem [#allocation2], %s268
        // Predicated region
        $region48: #{_nystrom_pf_forward_impl.1} parent=46 // pred_check
          %p270 = pneg %p58
        $region49: #{_nystrom_pf_forward_impl.1} parent=46 // pred_check_branch
          %272 = sbr.rel (%p270) target = $region51
        $region50: #{_nystrom_pf_forward_impl.1} parent=46 // pred_region
          _
        $region51: #{_nystrom_pf_forward_impl.1} parent=46 // pred_fallthru
          _
        %p273 = pneg %p32
        %p274 = pneg %p29
        %s275 = sand.u32 %s45, 1
        %s276 = sand.u32 %s45, 1
        %s277 = smul.addr %s276, 512
        %s278 = scalar_lea.vmem [#allocation2], %s277
        %p279 = pneg %p58
        %p280 = pneg %p55
        %p281 = pneg %p84
        %p282 = pneg %p81
        %s283 = sand.u32 %s71, 1
        %s284 = scalar_lea.sflag [#allocation4], %s283
        %s285 = sand.u32 %s71, 1
        %s286 = smul.addr %s285, 512
        %s287 = scalar_lea.vmem [#allocation3], %s286
        %s288 = smul.u32 2, %s16
        %s289 = smul.u32 2, %s16
        %v290 = vld [vmem:[%s0] sm:$0xff]
        %v291 = vld [vmem:[%s0 + $0x8] sm:$0xff]
        %v292 = vld [vmem:[%s0 + $0x10] sm:$0xff]
        %v293 = vld [vmem:[%s0 + $0x18] sm:$0xff]
        %v294 = vld [vmem:[%s0 + $0x20] sm:$0xff]
        %v295 = vld [vmem:[%s0 + $0x28] sm:$0xff]
        %v296 = vld [vmem:[%s0 + $0x30] sm:$0xff]
        %v297 = vld [vmem:[%s0 + $0x38] sm:$0xff]
        %v298 = vld [vmem:[%s0 + $0x40] sm:$0xff]
        %v299 = vld [vmem:[%s0 + $0x48] sm:$0xff]
        %v300 = vld [vmem:[%s0 + $0x50] sm:$0xff]
        %v301 = vld [vmem:[%s0 + $0x58] sm:$0xff]
        %v302 = vld [vmem:[%s0 + $0x60] sm:$0xff]
        %v303 = vld [vmem:[%s0 + $0x68] sm:$0xff]
        %v304 = vld [vmem:[%s0 + $0x70] sm:$0xff]
        %v305 = vld [vmem:[%s0 + $0x78] sm:$0xff]
        %v306 = vld [vmem:[%s0 + $0x80] sm:$0xff]
        %v307 = vld [vmem:[%s0 + $0x88] sm:$0xff]
        %v308 = vld [vmem:[%s0 + $0x90] sm:$0xff]
        %v309 = vld [vmem:[%s0 + $0x98] sm:$0xff]
        %v310 = vld [vmem:[%s0 + $0xa0] sm:$0xff]
        %v311 = vld [vmem:[%s0 + $0xa8] sm:$0xff]
        %v312 = vld [vmem:[%s0 + $0xb0] sm:$0xff]
        %v313 = vld [vmem:[%s0 + $0xb8] sm:$0xff]
        %v314 = vld [vmem:[%s0 + $0xc0] sm:$0xff]
        %v315 = vld [vmem:[%s0 + $0xc8] sm:$0xff]
        %v316 = vld [vmem:[%s0 + $0xd0] sm:$0xff]
        %v317 = vld [vmem:[%s0 + $0xd8] sm:$0xff]
        %v318 = vld [vmem:[%s0 + $0xe0] sm:$0xff]
        %v319 = vld [vmem:[%s0 + $0xe8] sm:$0xff]
        %v320 = vld [vmem:[%s0 + $0xf0] sm:$0xff]
        %v321 = vld [vmem:[%s0 + $0xf8] sm:$0xff]
        %v322 = vld [vmem:[%s0 + $0x100] sm:$0xff]
        %v323 = vld [vmem:[%s0 + $0x108] sm:$0xff]
        %v324 = vld [vmem:[%s0 + $0x110] sm:$0xff]
        %v325 = vld [vmem:[%s0 + $0x118] sm:$0xff]
        %v326 = vld [vmem:[%s0 + $0x120] sm:$0xff]
        %v327 = vld [vmem:[%s0 + $0x128] sm:$0xff]
        %v328 = vld [vmem:[%s0 + $0x130] sm:$0xff]
        %v329 = vld [vmem:[%s0 + $0x138] sm:$0xff]
        %v330 = vld [vmem:[%s0 + $0x140] sm:$0xff]
        %v331 = vld [vmem:[%s0 + $0x148] sm:$0xff]
        %v332 = vld [vmem:[%s0 + $0x150] sm:$0xff]
        %v333 = vld [vmem:[%s0 + $0x158] sm:$0xff]
        %v334 = vld [vmem:[%s0 + $0x160] sm:$0xff]
        %v335 = vld [vmem:[%s0 + $0x168] sm:$0xff]
        %v336 = vld [vmem:[%s0 + $0x170] sm:$0xff]
        %v337 = vld [vmem:[%s0 + $0x178] sm:$0xff]
        %v338 = vld [vmem:[%s0 + $0x180] sm:$0xff]
        %v339 = vld [vmem:[%s0 + $0x188] sm:$0xff]
        %v340 = vld [vmem:[%s0 + $0x190] sm:$0xff]
        %v341 = vld [vmem:[%s0 + $0x198] sm:$0xff]
        %v342 = vld [vmem:[%s0 + $0x1a0] sm:$0xff]
        %v343 = vld [vmem:[%s0 + $0x1a8] sm:$0xff]
        %v344 = vld [vmem:[%s0 + $0x1b0] sm:$0xff]
        %v345 = vld [vmem:[%s0 + $0x1b8] sm:$0xff]
        %v346 = vld [vmem:[%s0 + $0x1c0] sm:$0xff]
        %v347 = vld [vmem:[%s0 + $0x1c8] sm:$0xff]
        %v348 = vld [vmem:[%s0 + $0x1d0] sm:$0xff]
        %v349 = vld [vmem:[%s0 + $0x1d8] sm:$0xff]
        %v350 = vld [vmem:[%s0 + $0x1e0] sm:$0xff]
        %v351 = vld [vmem:[%s0 + $0x1e8] sm:$0xff]
        %v352 = vld [vmem:[%s0 + $0x1f0] sm:$0xff]
        %v353 = vld [vmem:[%s0 + $0x1f8] sm:$0xff]
        %v354 = vld [vmem:[%s269] sm:$0xff]
        %v355 = vld [vmem:[%s269 + $0x8] sm:$0xff]
        %v356 = vld [vmem:[%s269 + $0x10] sm:$0xff]
        %v357 = vld [vmem:[%s269 + $0x18] sm:$0xff]
        %v358 = vld [vmem:[%s269 + $0x20] sm:$0xff]
        %v359 = vld [vmem:[%s269 + $0x28] sm:$0xff]
        %v360 = vld [vmem:[%s269 + $0x30] sm:$0xff]
        %v361 = vld [vmem:[%s269 + $0x38] sm:$0xff]
        %v362 = vld [vmem:[%s269 + $0x40] sm:$0xff]
        %v363 = vld [vmem:[%s269 + $0x48] sm:$0xff]
        %v364 = vld [vmem:[%s269 + $0x50] sm:$0xff]
        %v365 = vld [vmem:[%s269 + $0x58] sm:$0xff]
        %v366 = vld [vmem:[%s269 + $0x60] sm:$0xff]
        %v367 = vld [vmem:[%s269 + $0x68] sm:$0xff]
        %v368 = vld [vmem:[%s269 + $0x70] sm:$0xff]
        %v369 = vld [vmem:[%s269 + $0x78] sm:$0xff]
        %v370 = vld [vmem:[%s269 + $0x80] sm:$0xff]
        %v371 = vld [vmem:[%s269 + $0x88] sm:$0xff]
        %v372 = vld [vmem:[%s269 + $0x90] sm:$0xff]
        %v373 = vld [vmem:[%s269 + $0x98] sm:$0xff]
        %v374 = vld [vmem:[%s269 + $0xa0] sm:$0xff]
        %v375 = vld [vmem:[%s269 + $0xa8] sm:$0xff]
        %v376 = vld [vmem:[%s269 + $0xb0] sm:$0xff]
        %v377 = vld [vmem:[%s269 + $0xb8] sm:$0xff]
        %v378 = vld [vmem:[%s269 + $0xc0] sm:$0xff]
        %v379 = vld [vmem:[%s269 + $0xc8] sm:$0xff]
        %v380 = vld [vmem:[%s269 + $0xd0] sm:$0xff]
        %v381 = vld [vmem:[%s269 + $0xd8] sm:$0xff]
        %v382 = vld [vmem:[%s269 + $0xe0] sm:$0xff]
        %v383 = vld [vmem:[%s269 + $0xe8] sm:$0xff]
        %v384 = vld [vmem:[%s269 + $0xf0] sm:$0xff]
        %v385 = vld [vmem:[%s269 + $0xf8] sm:$0xff]
        %v386 = vld [vmem:[%s269 + $0x100] sm:$0xff]
        %v387 = vld [vmem:[%s269 + $0x108] sm:$0xff]
        %v388 = vld [vmem:[%s269 + $0x110] sm:$0xff]
        %v389 = vld [vmem:[%s269 + $0x118] sm:$0xff]
        %v390 = vld [vmem:[%s269 + $0x120] sm:$0xff]
        %v391 = vld [vmem:[%s269 + $0x128] sm:$0xff]
        %v392 = vld [vmem:[%s269 + $0x130] sm:$0xff]
        %v393 = vld [vmem:[%s269 + $0x138] sm:$0xff]
        %v394 = vld [vmem:[%s269 + $0x140] sm:$0xff]
        %v395 = vld [vmem:[%s269 + $0x148] sm:$0xff]
        %v396 = vld [vmem:[%s269 + $0x150] sm:$0xff]
        %v397 = vld [vmem:[%s269 + $0x158] sm:$0xff]
        %v398 = vld [vmem:[%s269 + $0x160] sm:$0xff]
        %v399 = vld [vmem:[%s269 + $0x168] sm:$0xff]
        %v400 = vld [vmem:[%s269 + $0x170] sm:$0xff]
        %v401 = vld [vmem:[%s269 + $0x178] sm:$0xff]
        %v402 = vld [vmem:[%s269 + $0x180] sm:$0xff]
        %v403 = vld [vmem:[%s269 + $0x188] sm:$0xff]
        %v404 = vld [vmem:[%s269 + $0x190] sm:$0xff]
        %v405 = vld [vmem:[%s269 + $0x198] sm:$0xff]
        %v406 = vld [vmem:[%s269 + $0x1a0] sm:$0xff]
        %v407 = vld [vmem:[%s269 + $0x1a8] sm:$0xff]
        %v408 = vld [vmem:[%s269 + $0x1b0] sm:$0xff]
        %v409 = vld [vmem:[%s269 + $0x1b8] sm:$0xff]
        %v410 = vld [vmem:[%s269 + $0x1c0] sm:$0xff]
        %v411 = vld [vmem:[%s269 + $0x1c8] sm:$0xff]
        %v412 = vld [vmem:[%s269 + $0x1d0] sm:$0xff]
        %v413 = vld [vmem:[%s269 + $0x1d8] sm:$0xff]
        %v414 = vld [vmem:[%s269 + $0x1e0] sm:$0xff]
        %v415 = vld [vmem:[%s269 + $0x1e8] sm:$0xff]
        %v416 = vld [vmem:[%s269 + $0x1f0] sm:$0xff]
        %v417 = vld [vmem:[%s269 + $0x1f8] sm:$0xff]
        %418 = vmatprep.subr.mxu0 %v385
        %419 = vmatpush1.msra.mxu0 %v384
        %420 = vmatprep.subr.mxu0 %v383
        %421 = vmatpush1.msra.mxu0 %v382
        %422 = vmatprep.subr.mxu0 %v381
        %423 = vmatpush1.msra.mxu0 %v380
        %424 = vmatprep.subr.mxu0 %v379
        %425 = vmatpush1.msra.mxu0 %v378
        %426 = vmatprep.subr.mxu0 %v377
        %427 = vmatpush1.msra.mxu0 %v376
        %428 = vmatprep.subr.mxu0 %v375
        %429 = vmatpush1.msra.mxu0 %v374
        %430 = vmatprep.subr.mxu0 %v373
        %431 = vmatpush1.msra.mxu0 %v372
        %432 = vmatprep.subr.mxu0 %v371
        %433 = vmatpush1.msra.mxu0 %v370
        %434 = vmatprep.subr.mxu0 %v369
        %435 = vmatpush1.msra.mxu0 %v368
        %436 = vmatprep.subr.mxu0 %v367
        %437 = vmatpush1.msra.mxu0 %v366
        %438 = vmatprep.subr.mxu0 %v365
        %439 = vmatpush1.msra.mxu0 %v364
        %440 = vmatprep.subr.mxu0 %v363
        %441 = vmatpush1.msra.mxu0 %v362
        %442 = vmatprep.subr.mxu0 %v361
        %443 = vmatpush1.msra.mxu0 %v360
        %444 = vmatprep.subr.mxu0 %v359
        %445 = vmatpush1.msra.mxu0 %v358
        %446 = vmatprep.subr.mxu0 %v357
        %447 = vmatpush1.msra.mxu0 %v356
        %448 = vmatprep.subr.mxu0 %v355
        %449 = vmatpush1.msra.mxu0 %v354
        %450 = vmatprep.subr.mxu0 %v417
        %451 = vmatpush2.msra.mxu0 %v416
        %452 = vmatprep.subr.mxu0 %v415
        %453 = vmatpush2.msra.mxu0 %v414
        %454 = vmatprep.subr.mxu0 %v413
        %455 = vmatpush2.msra.mxu0 %v412
        %456 = vmatprep.subr.mxu0 %v411
        %457 = vmatpush2.msra.mxu0 %v410
        %458 = vmatprep.subr.mxu0 %v409
        %459 = vmatpush2.msra.mxu0 %v408
        %460 = vmatprep.subr.mxu0 %v407
        %461 = vmatpush2.msra.mxu0 %v406
        %462 = vmatprep.subr.mxu0 %v405
        %463 = vmatpush2.msra.mxu0 %v404
        %464 = vmatprep.subr.mxu0 %v403
        %465 = vmatpush2.msra.mxu0 %v402
        %466 = vmatprep.subr.mxu0 %v401
        %467 = vmatpush2.msra.mxu0 %v400
        %468 = vmatprep.subr.mxu0 %v399
        %469 = vmatpush2.msra.mxu0 %v398
        %470 = vmatprep.subr.mxu0 %v397
        %471 = vmatpush2.msra.mxu0 %v396
        %472 = vmatprep.subr.mxu0 %v395
        %473 = vmatpush2.msra.mxu0 %v394
        %474 = vmatprep.subr.mxu0 %v393
        %475 = vmatpush2.msra.mxu0 %v392
        %476 = vmatprep.subr.mxu0 %v391
        %477 = vmatpush2.msra.mxu0 %v390
        %478 = vmatprep.subr.mxu0 %v389
        %479 = vmatpush2.msra.mxu0 %v388
        %480 = vmatprep.subr.mxu0 %v387
        %481 = vmatpush2.msra.mxu0 %v386
        %482 = vmatprep.mubr.f32.mxu0 %v291
        %483 = vmatmul.mubr.f32.gmra.mxu0 %v290
        %v484 = vpop.f32.mrf.mxu0
        %v485 = vadd.f32 0.0, %v484
        %v486 = vpop.f32.mrf.mxu0
        %v487 = vadd.f32 0.0, %v486
        %488 = vmatprep.mubr.f32.mxu0 %v293
        %489 = vmatmul.mubr.f32.gmra.mxu0 %v292
        %v490 = vpop.f32.mrf.mxu0
        %v491 = vadd.f32 0.0, %v490
        %v492 = vpop.f32.mrf.mxu0
        %v493 = vadd.f32 0.0, %v492
        %494 = vmatprep.mubr.f32.mxu0 %v295
        %495 = vmatmul.mubr.f32.gmra.mxu0 %v294
        %v496 = vpop.f32.mrf.mxu0
        %v497 = vadd.f32 0.0, %v496
        %v498 = vpop.f32.mrf.mxu0
        %v499 = vadd.f32 0.0, %v498
        %500 = vmatprep.mubr.f32.mxu0 %v297
        %501 = vmatmul.mubr.f32.gmra.mxu0 %v296
        %v502 = vpop.f32.mrf.mxu0
        %v503 = vadd.f32 0.0, %v502
        %v504 = vpop.f32.mrf.mxu0
        %v505 = vadd.f32 0.0, %v504
        %506 = vmatprep.mubr.f32.mxu0 %v299
        %507 = vmatmul.mubr.f32.gmra.mxu0 %v298
        %v508 = vpop.f32.mrf.mxu0
        %v509 = vadd.f32 0.0, %v508
        %v510 = vpop.f32.mrf.mxu0
        %v511 = vadd.f32 0.0, %v510
        %512 = vmatprep.mubr.f32.mxu0 %v301
        %513 = vmatmul.mubr.f32.gmra.mxu0 %v300
        %v514 = vpop.f32.mrf.mxu0
        %v515 = vadd.f32 0.0, %v514
        %v516 = vpop.f32.mrf.mxu0
        %v517 = vadd.f32 0.0, %v516
        %518 = vmatprep.mubr.f32.mxu0 %v303
        %519 = vmatmul.mubr.f32.gmra.mxu0 %v302
        %v520 = vpop.f32.mrf.mxu0
        %v521 = vadd.f32 0.0, %v520
        %v522 = vpop.f32.mrf.mxu0
        %v523 = vadd.f32 0.0, %v522
        %524 = vmatprep.mubr.f32.mxu0 %v305
        %525 = vmatmul.mubr.f32.gmra.mxu0 %v304
        %v526 = vpop.f32.mrf.mxu0
        %v527 = vadd.f32 0.0, %v526
        %v528 = vpop.f32.mrf.mxu0
        %v529 = vadd.f32 0.0, %v528
        %530 = vmatprep.mubr.f32.mxu0 %v307
        %531 = vmatmul.mubr.f32.gmra.mxu0 %v306
        %v532 = vpop.f32.mrf.mxu0
        %v533 = vadd.f32 0.0, %v532
        %v534 = vpop.f32.mrf.mxu0
        %v535 = vadd.f32 0.0, %v534
        %536 = vmatprep.mubr.f32.mxu0 %v309
        %537 = vmatmul.mubr.f32.gmra.mxu0 %v308
        %v538 = vpop.f32.mrf.mxu0
        %v539 = vadd.f32 0.0, %v538
        %v540 = vpop.f32.mrf.mxu0
        %v541 = vadd.f32 0.0, %v540
        %542 = vmatprep.mubr.f32.mxu0 %v311
        %543 = vmatmul.mubr.f32.gmra.mxu0 %v310
        %v544 = vpop.f32.mrf.mxu0
        %v545 = vadd.f32 0.0, %v544
        %v546 = vpop.f32.mrf.mxu0
        %v547 = vadd.f32 0.0, %v546
        %548 = vmatprep.mubr.f32.mxu0 %v313
        %549 = vmatmul.mubr.f32.gmra.mxu0 %v312
        %v550 = vpop.f32.mrf.mxu0
        %v551 = vadd.f32 0.0, %v550
        %v552 = vpop.f32.mrf.mxu0
        %v553 = vadd.f32 0.0, %v552
        %554 = vmatprep.mubr.f32.mxu0 %v315
        %555 = vmatmul.mubr.f32.gmra.mxu0 %v314
        %v556 = vpop.f32.mrf.mxu0
        %v557 = vadd.f32 0.0, %v556
        %v558 = vpop.f32.mrf.mxu0
        %v559 = vadd.f32 0.0, %v558
        %560 = vmatprep.mubr.f32.mxu0 %v317
        %561 = vmatmul.mubr.f32.gmra.mxu0 %v316
        %v562 = vpop.f32.mrf.mxu0
        %v563 = vadd.f32 0.0, %v562
        %v564 = vpop.f32.mrf.mxu0
        %v565 = vadd.f32 0.0, %v564
        %566 = vmatprep.mubr.f32.mxu0 %v319
        %567 = vmatmul.mubr.f32.gmra.mxu0 %v318
        %v568 = vpop.f32.mrf.mxu0
        %v569 = vadd.f32 0.0, %v568
        %v570 = vpop.f32.mrf.mxu0
        %v571 = vadd.f32 0.0, %v570
        %572 = vmatprep.mubr.f32.mxu0 %v321
        %573 = vmatmul.mubr.f32.gmra.mxu0 %v320
        %v574 = vpop.f32.mrf.mxu0
        %v575 = vadd.f32 0.0, %v574
        %v576 = vpop.f32.mrf.mxu0
        %v577 = vadd.f32 0.0, %v576
        %578 = vmatprep.mubr.f32.mxu0 %v323
        %579 = vmatmul.mubr.f32.gmra.mxu0 %v322
        %v580 = vpop.f32.mrf.mxu0
        %v581 = vadd.f32 0.0, %v580
        %v582 = vpop.f32.mrf.mxu0
        %v583 = vadd.f32 0.0, %v582
        %584 = vmatprep.mubr.f32.mxu0 %v325
        %585 = vmatmul.mubr.f32.gmra.mxu0 %v324
        %v586 = vpop.f32.mrf.mxu0
        %v587 = vadd.f32 0.0, %v586
        %v588 = vpop.f32.mrf.mxu0
        %v589 = vadd.f32 0.0, %v588
        %590 = vmatprep.mubr.f32.mxu0 %v327
        %591 = vmatmul.mubr.f32.gmra.mxu0 %v326
        %v592 = vpop.f32.mrf.mxu0
        %v593 = vadd.f32 0.0, %v592
        %v594 = vpop.f32.mrf.mxu0
        %v595 = vadd.f32 0.0, %v594
        %596 = vmatprep.mubr.f32.mxu0 %v329
        %597 = vmatmul.mubr.f32.gmra.mxu0 %v328
        %v598 = vpop.f32.mrf.mxu0
        %v599 = vadd.f32 0.0, %v598
        %v600 = vpop.f32.mrf.mxu0
        %v601 = vadd.f32 0.0, %v600
        %602 = vmatprep.mubr.f32.mxu0 %v331
        %603 = vmatmul.mubr.f32.gmra.mxu0 %v330
        %v604 = vpop.f32.mrf.mxu0
        %v605 = vadd.f32 0.0, %v604
        %v606 = vpop.f32.mrf.mxu0
        %v607 = vadd.f32 0.0, %v606
        %608 = vmatprep.mubr.f32.mxu0 %v333
        %609 = vmatmul.mubr.f32.gmra.mxu0 %v332
        %v610 = vpop.f32.mrf.mxu0
        %v611 = vadd.f32 0.0, %v610
        %v612 = vpop.f32.mrf.mxu0
        %v613 = vadd.f32 0.0, %v612
        %614 = vmatprep.mubr.f32.mxu0 %v335
        %615 = vmatmul.mubr.f32.gmra.mxu0 %v334
        %v616 = vpop.f32.mrf.mxu0
        %v617 = vadd.f32 0.0, %v616
        %v618 = vpop.f32.mrf.mxu0
        %v619 = vadd.f32 0.0, %v618
        %620 = vmatprep.mubr.f32.mxu0 %v337
        %621 = vmatmul.mubr.f32.gmra.mxu0 %v336
        %v622 = vpop.f32.mrf.mxu0
        %v623 = vadd.f32 0.0, %v622
        %v624 = vpop.f32.mrf.mxu0
        %v625 = vadd.f32 0.0, %v624
        %626 = vmatprep.mubr.f32.mxu0 %v339
        %627 = vmatmul.mubr.f32.gmra.mxu0 %v338
        %v628 = vpop.f32.mrf.mxu0
        %v629 = vadd.f32 0.0, %v628
        %v630 = vpop.f32.mrf.mxu0
        %v631 = vadd.f32 0.0, %v630
        %632 = vmatprep.mubr.f32.mxu0 %v341
        %633 = vmatmul.mubr.f32.gmra.mxu0 %v340
        %v634 = vpop.f32.mrf.mxu0
        %v635 = vadd.f32 0.0, %v634
        %v636 = vpop.f32.mrf.mxu0
        %v637 = vadd.f32 0.0, %v636
        %638 = vmatprep.mubr.f32.mxu0 %v343
        %639 = vmatmul.mubr.f32.gmra.mxu0 %v342
        %v640 = vpop.f32.mrf.mxu0
        %v641 = vadd.f32 0.0, %v640
        %v642 = vpop.f32.mrf.mxu0
        %v643 = vadd.f32 0.0, %v642
        %644 = vmatprep.mubr.f32.mxu0 %v345
        %645 = vmatmul.mubr.f32.gmra.mxu0 %v344
        %v646 = vpop.f32.mrf.mxu0
        %v647 = vadd.f32 0.0, %v646
        %v648 = vpop.f32.mrf.mxu0
        %v649 = vadd.f32 0.0, %v648
        %650 = vmatprep.mubr.f32.mxu0 %v347
        %651 = vmatmul.mubr.f32.gmra.mxu0 %v346
        %v652 = vpop.f32.mrf.mxu0
        %v653 = vadd.f32 0.0, %v652
        %v654 = vpop.f32.mrf.mxu0
        %v655 = vadd.f32 0.0, %v654
        %656 = vmatprep.mubr.f32.mxu0 %v349
        %657 = vmatmul.mubr.f32.gmra.mxu0 %v348
        %v658 = vpop.f32.mrf.mxu0
        %v659 = vadd.f32 0.0, %v658
        %v660 = vpop.f32.mrf.mxu0
        %v661 = vadd.f32 0.0, %v660
        %662 = vmatprep.mubr.f32.mxu0 %v351
        %663 = vmatmul.mubr.f32.gmra.mxu0 %v350
        %v664 = vpop.f32.mrf.mxu0
        %v665 = vadd.f32 0.0, %v664
        %v666 = vpop.f32.mrf.mxu0
        %v667 = vadd.f32 0.0, %v666
        %668 = vmatprep.mubr.f32.mxu0 %v353
        %669 = vmatmul.mubr.f32.gmra.mxu0 %v352
        %v670 = vpop.f32.mrf.mxu0
        %v671 = vadd.f32 0.0, %v670
        %v672 = vpop.f32.mrf.mxu0
        %v673 = vadd.f32 0.0, %v672
        %674 = vdwg.mxu0
        %675 = vst [vmem:[%s287] sm:$0xff] %v485
        %676 = vst [vmem:[%s287 + $0x8] sm:$0xff] %v487
        %677 = vst [vmem:[%s287 + $0x10] sm:$0xff] %v491
        %678 = vst [vmem:[%s287 + $0x18] sm:$0xff] %v493
        %679 = vst [vmem:[%s287 + $0x20] sm:$0xff] %v497
        %680 = vst [vmem:[%s287 + $0x28] sm:$0xff] %v499
        %681 = vst [vmem:[%s287 + $0x30] sm:$0xff] %v503
        %682 = vst [vmem:[%s287 + $0x38] sm:$0xff] %v505
        %683 = vst [vmem:[%s287 + $0x40] sm:$0xff] %v509
        %684 = vst [vmem:[%s287 + $0x48] sm:$0xff] %v511
        %685 = vst [vmem:[%s287 + $0x50] sm:$0xff] %v515
        %686 = vst [vmem:[%s287 + $0x58] sm:$0xff] %v517
        %687 = vst [vmem:[%s287 + $0x60] sm:$0xff] %v521
        %688 = vst [vmem:[%s287 + $0x68] sm:$0xff] %v523
        %689 = vst [vmem:[%s287 + $0x70] sm:$0xff] %v527
        %690 = vst [vmem:[%s287 + $0x78] sm:$0xff] %v529
        %691 = vst [vmem:[%s287 + $0x80] sm:$0xff] %v533
        %692 = vst [vmem:[%s287 + $0x88] sm:$0xff] %v535
        %693 = vst [vmem:[%s287 + $0x90] sm:$0xff] %v539
        %694 = vst [vmem:[%s287 + $0x98] sm:$0xff] %v541
        %695 = vst [vmem:[%s287 + $0xa0] sm:$0xff] %v545
        %696 = vst [vmem:[%s287 + $0xa8] sm:$0xff] %v547
        %697 = vst [vmem:[%s287 + $0xb0] sm:$0xff] %v551
        %698 = vst [vmem:[%s287 + $0xb8] sm:$0xff] %v553
        %699 = vst [vmem:[%s287 + $0xc0] sm:$0xff] %v557
        %700 = vst [vmem:[%s287 + $0xc8] sm:$0xff] %v559
        %701 = vst [vmem:[%s287 + $0xd0] sm:$0xff] %v563
        %702 = vst [vmem:[%s287 + $0xd8] sm:$0xff] %v565
        %703 = vst [vmem:[%s287 + $0xe0] sm:$0xff] %v569
        %704 = vst [vmem:[%s287 + $0xe8] sm:$0xff] %v571
        %705 = vst [vmem:[%s287 + $0xf0] sm:$0xff] %v575
        %706 = vst [vmem:[%s287 + $0xf8] sm:$0xff] %v577
        %707 = vst [vmem:[%s287 + $0x100] sm:$0xff] %v581
        %708 = vst [vmem:[%s287 + $0x108] sm:$0xff] %v583
        %709 = vst [vmem:[%s287 + $0x110] sm:$0xff] %v587
        %710 = vst [vmem:[%s287 + $0x118] sm:$0xff] %v589
        %711 = vst [vmem:[%s287 + $0x120] sm:$0xff] %v593
        %712 = vst [vmem:[%s287 + $0x128] sm:$0xff] %v595
        %713 = vst [vmem:[%s287 + $0x130] sm:$0xff] %v599
        %714 = vst [vmem:[%s287 + $0x138] sm:$0xff] %v601
        %715 = vst [vmem:[%s287 + $0x140] sm:$0xff] %v605
        %716 = vst [vmem:[%s287 + $0x148] sm:$0xff] %v607
        %717 = vst [vmem:[%s287 + $0x150] sm:$0xff] %v611
        %718 = vst [vmem:[%s287 + $0x158] sm:$0xff] %v613
        %719 = vst [vmem:[%s287 + $0x160] sm:$0xff] %v617
        %720 = vst [vmem:[%s287 + $0x168] sm:$0xff] %v619
        %721 = vst [vmem:[%s287 + $0x170] sm:$0xff] %v623
        %722 = vst [vmem:[%s287 + $0x178] sm:$0xff] %v625
        %723 = vst [vmem:[%s287 + $0x180] sm:$0xff] %v629
        %724 = vst [vmem:[%s287 + $0x188] sm:$0xff] %v631
        %725 = vst [vmem:[%s287 + $0x190] sm:$0xff] %v635
        %726 = vst [vmem:[%s287 + $0x198] sm:$0xff] %v637
        %727 = vst [vmem:[%s287 + $0x1a0] sm:$0xff] %v641
        %728 = vst [vmem:[%s287 + $0x1a8] sm:$0xff] %v643
        %729 = vst [vmem:[%s287 + $0x1b0] sm:$0xff] %v647
        %730 = vst [vmem:[%s287 + $0x1b8] sm:$0xff] %v649
        %731 = vst [vmem:[%s287 + $0x1c0] sm:$0xff] %v653
        %732 = vst [vmem:[%s287 + $0x1c8] sm:$0xff] %v655
        %733 = vst [vmem:[%s287 + $0x1d0] sm:$0xff] %v659
        %734 = vst [vmem:[%s287 + $0x1d8] sm:$0xff] %v661
        %735 = vst [vmem:[%s287 + $0x1e0] sm:$0xff] %v665
        %736 = vst [vmem:[%s287 + $0x1e8] sm:$0xff] %v667
        %737 = vst [vmem:[%s287 + $0x1f0] sm:$0xff] %v671
        %738 = vst [vmem:[%s287 + $0x1f8] sm:$0xff] %v673
        %s739 = sand.u32 %s71, 1
        %s740 = scalar_lea.sflag [#allocation4], %s739
        %s741 = sand.u32 %s71, 1
        %s742 = smul.addr %s741, 512
        %s743 = scalar_lea.vmem [#allocation3], %s742
        // Predicated region
        $region52: #{_nystrom_pf_forward_impl.1} parent=46 // pred_check
          %p744 = pneg %p81
        $region53: #{_nystrom_pf_forward_impl.1} parent=46 // pred_check_branch
          %746 = sbr.rel (%p744) target = $region55
        $region54: #{_nystrom_pf_forward_impl.1} parent=46 // pred_region
          %s747 = smul.u32 2, %s16
          %s749 = ssub.s32 8192, 8192
          %750 = vsyncadd %s740, %s749
          %s751 = smul.addr %s747, 128
          %s752 = scalar_lea.hbm %s2, %s751
          %s753 = sshll.u32 %s743, 4
          %s754 = int_to_ptr.vmem [resolvable:$true] %s753
          %759 = dma.vmem_to_hbm [thread:$0]  %s754, 8192, %s752, %s740, 256, 512, 16
        $region55: #{_nystrom_pf_forward_impl.1} parent=46 // pred_fallthru
          _
      $region47: #{_nystrom_pf_forward_impl.1} parent=5 // pred_fallthru
        _
      %p760 = scmp.le.s32.totalorder 2, %s11
      // Predicated region
      $region56: #{_nystrom_pf_forward_impl.1} parent=5 // pred_check
        %p761 = pneg %p760
      $region57: #{_nystrom_pf_forward_impl.1} parent=5 // pred_check_branch
        %763 = sbr.rel (%p761) target = $region59
      $region58: #{_nystrom_pf_forward_impl.1} parent=5 // pred_region
        %s764 = ssub.s32 %s11, 2
        // Predicated region
        $region60: #{_nystrom_pf_forward_impl.1} parent=58 // pred_check
          %p765 = pneg %p87
        $region61: #{_nystrom_pf_forward_impl.1} parent=58 // pred_check_branch
          %767 = sbr.rel (%p765) target = $region63
        $region62: #{_nystrom_pf_forward_impl.1} parent=58 // pred_region
          %s768 = sand.u32 %s72, 1
          %s769 = scalar_lea.sflag [#allocation4], %s768
          %s770 = sand.u32 %s72, 1
          %s771 = smul.addr %s770, 512
          %s772 = scalar_lea.vmem [#allocation3], %s771
          %773 = dma.done %s769, 8192
        $region63: #{_nystrom_pf_forward_impl.1} parent=58 // pred_fallthru
          _
      $region59: #{_nystrom_pf_forward_impl.1} parent=5 // pred_fallthru
        _
    $region6: #{_nystrom_pf_forward_impl.1} parent=1 // loop_footer
      %s15 = sadd.s32 1, %s11
    $region7: #{_nystrom_pf_forward_impl.1} parent=1 // loop_footer_branch
      %10 = sbr.rel target = $region3
    $region8: #{_nystrom_pf_forward_impl.1} parent=1 // loop_exit
      _
    %774 = vsyncpa [#allocation4], 1
    %s775 = scalar_lea.sflag [#allocation4], 1
    %776 = vsyncpa %s775, 1

</llo_original>
